<compile_context>
chip_gen: v7x
topology: tpu7x:2x2x1
jax: 0.10.0
libtpu: 0.0.40
codegen_flags: <defaults>
</compile_context>

<pallas_src>
import jax
import jax.numpy as jnp
from jax.experimental import pallas as pl
from jax.experimental.pallas import tpu as pltpu


# ----------------------------------------------------------------------------- kernels

def _make_planar_kernel(reduce_axis):
    """Planar-flow kernel body; reduce_axis is the flow (Z) axis of the 2-D tiles."""

    def planar_kernel(z_ref, u_ref, w_ref, b_ref, zout_ref, ld_ref):
        z = z_ref[...].astype(jnp.float32)
        u = u_ref[...].astype(jnp.float32)
        w = w_ref[...].astype(jnp.float32)
        b = b_ref[...].astype(jnp.float32)

        # Per-sample rank-1 contractions (VPU multiply + reduction; deliberately no MXU).
        uw = jnp.sum(w * u, axis=reduce_axis, keepdims=True)
        w_norm_sq = jnp.sum(w * w, axis=reduce_axis, keepdims=True)
        # Padded rows/lanes of a partial final block may hold garbage; keep them finite
        # so the (masked) stores never see inf/NaN (debug-mode friendliness).
        w_norm_sq = jnp.maximum(w_norm_sq, jnp.finfo(jnp.float32).tiny)

        m_uw = -1.0 + jnp.logaddexp(uw, 0.0)  # numerically-stable softplus
        # Per-sample scalar scale, hoisted off the (·,Z)x(Z,·) broadcast; exact reciprocal
        # preserves the invertibility correction's accuracy.
        scale = (m_uw - uw) * pl.reciprocal(w_norm_sq, approx=False)
        u_hat = u + scale * w

        wzb = jnp.sum(w * z, axis=reduce_axis, keepdims=True) + b
        h = jnp.tanh(wzb)

        # z' = z + u_hat * tanh(w^T z + b)
        zout_ref[...] = (z + u_hat * h).astype(zout_ref.dtype)

        # psi^T u_hat = (1 - h^2) * (w . u_hat), and w . u_hat == m_uw exactly:
        #   w.u_hat = uw + (m_uw - uw) * ||w||^2 / ||w||^2 = m_uw
        der_h = 1.0 - h * h
        ld_ref[...] = jnp.log(jnp.abs(1.0 + der_h * m_uw)).astype(ld_ref.dtype)

    return planar_kernel


_planar_kernel_rows = _make_planar_kernel(reduce_axis=1)   # tiles (Bt, Z), reduce Z
_planar_kernel_lanes = _make_planar_kernel(reduce_axis=0)  # tiles (Z, Bt), reduce Z


# ----------------------------------------------------------------------- tiling helpers

_TILE_BYTES_MAX = 4 << 20   # per-input-tile upper bound (review: 2-4 MiB saturates HBM)
_TILE_BYTES_MIN = 1 << 20   # don't shrink tiles below ~1 MiB just to add grid steps


def _round_down(x, m):
    return max(m, (x // m) * m)


def _round_up(x, m):
    return ((x + m - 1) // m) * m


def _choose_b_tile(B, Z, unit, *, target_steps=16):
    """Batch tile (multiple of `unit`): 1-4 MiB f32 tiles, >= ~16 grid steps for big B."""
    bytes_per_sample = 4 * max(Z, 1)
    cap = _round_down(_TILE_BYTES_MAX // bytes_per_sample, unit)
    floor = min(cap, _round_down(_TILE_BYTES_MIN // bytes_per_sample, unit))
    if B <= floor:
        return B
    desired = _round_up(-(-B // target_steps), unit)   # >= target_steps grid steps
    return max(floor, min(cap, desired))


def _vmem_cap_bytes():
    cap = 64 << 20                                     # conservative default = v7x physical
    try:
        info = pltpu.get_tpu_info()
        cap = int(getattr(info, "vmem_capacity_bytes", cap))
    except Exception:
        pass
    return (3 * cap) // 4                              # ~48 MiB on v7x, ~96 MiB on v5e/v6e


def _vmem_limit_bytes(tile_rows, tile_cols, io_itemsize):
    tile_elems = tile_rows * tile_cols
    per_step = tile_elems * 4 * io_itemsize                       # z,u,w in + z' out tiles
    per_step += max(tile_rows, tile_cols) * (io_itemsize + 4)     # b in + log-det out
    total = 2 * per_step                                          # double-buffered pipeline
    total += 6 * tile_elems * 4                                   # f32 in-kernel temporaries
    total += 4 << 20                                              # compiler-scratch slack
    return int(min(_vmem_cap_bytes(), max(total, 32 << 20)))


def _cost_estimate(B, Z, io_itemsize):
    bytes_accessed = B * Z * 4 * io_itemsize + B * (io_itemsize + 4)
    return pl.CostEstimate(
        flops=10 * B * Z,
        transcendentals=3 * B,             # softplus (exp+log) + tanh per sample
        bytes_accessed=int(bytes_accessed),
    )


# ---------------------------------------------------------------------------- wrappers

def planar_forward_t(z_t, u_t, w_t, b_t, *, b_tile=None):
    """Lane-dense transposed Planar forward (batch on the lane axis).

    z_t, u_t, w_t: (Z, B), b_t: (1, B) -> (z': (Z, B) in z_t.dtype, log|det J|: (1, B) f32)
    Intended for flow chains that keep z in (Z, B) so the HBM transpose is paid once.
    """
    Z, B = z_t.shape
    if b_tile is None:
        b_tile = _choose_b_tile(B, Z, unit=128)
    elif b_tile != B and (b_tile <= 0 or b_tile % 128 != 0):
        raise ValueError(f"b_tile must equal B or be a positive multiple of 128, got {b_tile}")

    io_itemsize = jnp.dtype(z_t.dtype).itemsize
    grid = (pl.cdiv(B, b_tile),)

    z_out, ld_out = pl.pallas_call(
        _planar_kernel_lanes,
        out_shape=(
            jax.ShapeDtypeStruct((Z, B), z_t.dtype),
            jax.ShapeDtypeStruct((1, B), jnp.float32),
        ),
        grid=grid,
        in_specs=[
            pl.BlockSpec((Z, b_tile), lambda i: (0, i)),
            pl.BlockSpec((Z, b_tile), lambda i: (0, i)),
            pl.BlockSpec((Z, b_tile), lambda i: (0, i)),
            pl.BlockSpec((1, b_tile), lambda i: (0, i)),
        ],
        out_specs=(
            pl.BlockSpec((Z, b_tile), lambda i: (0, i)),
            pl.BlockSpec((1, b_tile), lambda i: (0, i)),
        ),
        compiler_params=pltpu.CompilerParams(
            dimension_semantics=("parallel",),
            vmem_limit_bytes=_vmem_limit_bytes(Z, b_tile, io_itemsize),
        ),
        cost_estimate=_cost_estimate(B, Z, io_itemsize),
    )(z_t, u_t, w_t, b_t)

    return z_out, ld_out


def planar_forward(zk, u, w, b, *, b_tile=None, layout="rows"):
    """Planar-flow forward matching the PyTorch module.

    zk: (B, Z), u: (B, Z, 1), w: (B, 1, Z), b: (B, 1, 1)
    -> (z': (B, Z) in zk.dtype, log_det_jacobian: (B,) float32)
    """
    B, Z = zk.shape
    u2 = u.reshape(B, Z)
    w2 = w.reshape(B, Z)
    b2 = b.reshape(B, 1)

    if layout == "lanes":
        # TODO(synk): in a K-step flow chain keep z in (Z, B) across all steps and call
        # planar_forward_t directly so the HBM transpose is paid once, not per step.
        z_t, ld_t = planar_forward_t(zk.T, u2.T, w2.T, b2.T, b_tile=b_tile)
        return z_t.T, ld_t.reshape(B)

    if b_tile is None:
        b_tile = _choose_b_tile(B, Z, unit=8)
    elif b_tile != B and (b_tile <= 0 or b_tile % 8 != 0):
        raise ValueError(f"b_tile must equal B or be a positive multiple of 8, got {b_tile}")

    io_itemsize = jnp.dtype(zk.dtype).itemsize
    grid = (pl.cdiv(B, b_tile),)

    z_out, ld_out = pl.pallas_call(
        _planar_kernel_rows,
        out_shape=(
            jax.ShapeDtypeStruct((B, Z), zk.dtype),
            jax.ShapeDtypeStruct((B, 1), jnp.float32),
        ),
        grid=grid,
        in_specs=[
            pl.BlockSpec((b_tile, Z), lambda i: (i, 0)),
            pl.BlockSpec((b_tile, Z), lambda i: (i, 0)),
            pl.BlockSpec((b_tile, Z), lambda i: (i, 0)),
            pl.BlockSpec((b_tile, 1), lambda i: (i, 0)),
        ],
        out_specs=(
            pl.BlockSpec((b_tile, Z), lambda i: (i, 0)),
            pl.BlockSpec((b_tile, 1), lambda i: (i, 0)),
        ),
        compiler_params=pltpu.CompilerParams(
            dimension_semantics=("parallel",),
            vmem_limit_bytes=_vmem_limit_bytes(b_tile, Z, io_itemsize),
        ),
        cost_estimate=_cost_estimate(B, Z, io_itemsize),
    )(zk, u2, w2, b2)

    return z_out, ld_out.reshape(B)


# --------------------------------------------------------------------------- reference

def planar_reference(zk, u, w, b):
    """Pure-JAX reference mirroring the PyTorch module exactly."""
    zk3 = zk[:, :, None]                                       # (B, Z, 1)
    uw = jnp.matmul(w, u)                                      # (B, 1, 1)
    m_uw = -1.0 + jax.nn.softplus(uw)
    w_norm_sq = jnp.sum(w ** 2, axis=2, keepdims=True)         # (B, 1, 1)
    u_hat = u + (m_uw - uw) * jnp.swapaxes(w, 2, 1) / w_norm_sq
    wzb = jnp.matmul(w, zk3) + b                                # (B, 1, 1)
    z = zk3 + u_hat * jnp.tanh(wzb)
    z = z[:, :, 0]
    psi = w * (1.0 - jnp.tanh(wzb) ** 2)
    ldj = jnp.log(jnp.abs(1.0 + jnp.matmul(psi, u_hat)))
    return z, ldj[:, 0, 0]


# -------------------------------------------------------------------------------- test

def _make_inputs(B, Z, seed, dtype):
    key = jax.random.PRNGKey(seed)
    k_z, k_u, k_w, k_b = jax.random.split(key, 4)
    zk = jax.random.normal(k_z, (B, Z), dtype=jnp.float32).astype(dtype)
    u = jax.random.normal(k_u, (B, Z, 1), dtype=jnp.float32).astype(dtype)
    w = jax.random.normal(k_w, (B, 1, Z), dtype=jnp.float32).astype(dtype)
    b = jax.random.normal(k_b, (B, 1, 1), dtype=jnp.float32).astype(dtype)
    return zk, u, w, b


def _check(B, Z, seed, *, b_tile=None, layout="rows", dtype=jnp.float32,
           atol=1e-5, rtol=1e-5):
    zk, u, w, b = _make_inputs(B, Z, seed, dtype)

    z_out, ldj_out = planar_forward(zk, u, w, b, b_tile=b_tile, layout=layout)
    jax.block_until_ready((z_out, ldj_out))

    z_ref, ldj_ref = planar_reference(
        zk.astype(jnp.float32), u.astype(jnp.float32),
        w.astype(jnp.float32), b.astype(jnp.float32))

    assert z_out.shape == (B, Z) and ldj_out.shape == (B,)
    assert z_out.dtype == zk.dtype and ldj_out.dtype == jnp.float32
    assert jnp.allclose(z_out.astype(jnp.float32), z_ref, atol=atol, rtol=rtol), \
        ("z mismatch", B, Z, layout, dtype)
    assert jnp.allclose(ldj_out, ldj_ref, atol=max(atol, 1e-4), rtol=max(rtol, 1e-4)), \
        ("ldj mismatch", B, Z, layout, dtype)


if __name__ == "__main__":
    # Module-spec sizes: batch_size=4, z_size=32 (single tile, row layout).
    _check(B=4, Z=32, seed=0)
    # Multi-tile grid over the batch (divisible).
    _check(B=32, Z=32, seed=1, b_tile=8)
    # Partial final batch block (masked stores, clamped padded rows).
    _check(B=20, Z=32, seed=2, b_tile=8)
    # bf16 I/O path (f32 math inside the kernel).
    _check(B=32, Z=32, seed=3, dtype=jnp.bfloat16, atol=5e-2, rtol=2e-2)
    # Lane-dense transposed layout (batch on the lane axis) — best for small Z / v7x.
    _check(B=4, Z=32, seed=4, layout="lanes")
    _check(B=256, Z=32, seed=5, layout="lanes")
    _check(B=200, Z=32, seed=6, layout="lanes", b_tile=128)  # partial final lane block

    print("KERNEL_OK")
</pallas_src>

<mosaic_0001>
module attributes {stable_mosaic.version = 11 : i64} {
  func.func @planar_kernel(%arg0: i32, %arg1: memref<4x32xf32, #tpu.memory_space<vmem>>, %arg2: memref<4x32xf32, #tpu.memory_space<vmem>>, %arg3: memref<4x32xf32, #tpu.memory_space<vmem>>, %arg4: memref<4x1xf32, #tpu.memory_space<vmem>>, %arg5: memref<4x32xf32, #tpu.memory_space<vmem>>, %arg6: memref<4x1xf32, #tpu.memory_space<vmem>>) attributes {dimension_semantics = [#tpu.dimension_semantics<parallel>], iteration_bounds = array<i64: 1>, scalar_prefetch = 0 : i64, scratch_operands = 0 : i64, tpu.core_type = #tpu.core_type<tc>, window_params = [{transform_indices = @transform_0, window_bounds = array<i64: 4, 32>}, {transform_indices = @transform_1, window_bounds = array<i64: 4, 32>}, {transform_indices = @transform_2, window_bounds = array<i64: 4, 32>}, {transform_indices = @transform_3, window_bounds = array<i64: 4, 1>}, {transform_indices = @transform_4, window_bounds = array<i64: 4, 32>}, {transform_indices = @transform_5, window_bounds = array<i64: 4, 1>}]} {
    %c0 = arith.constant 0 : index
    %c0_0 = arith.constant 0 : index
    %0 = vector.load %arg1[%c0, %c0_0] : memref<4x32xf32, #tpu.memory_space<vmem>>, vector<4x32xf32>
    %c0_1 = arith.constant 0 : index
    %c0_2 = arith.constant 0 : index
    %1 = vector.load %arg2[%c0_1, %c0_2] : memref<4x32xf32, #tpu.memory_space<vmem>>, vector<4x32xf32>
    %c0_3 = arith.constant 0 : index
    %c0_4 = arith.constant 0 : index
    %2 = vector.load %arg3[%c0_3, %c0_4] : memref<4x32xf32, #tpu.memory_space<vmem>>, vector<4x32xf32>
    %c0_5 = arith.constant 0 : index
    %c0_6 = arith.constant 0 : index
    %3 = vector.load %arg4[%c0_5, %c0_6] : memref<4x1xf32, #tpu.memory_space<vmem>>, vector<4x1xf32>
    %4 = arith.mulf %2, %1 : vector<4x32xf32>
    %cst = arith.constant dense<0.000000e+00> : vector<4xf32>
    %5 = vector.multi_reduction <add>, %4, %cst [1] : vector<4x32xf32> to vector<4xf32>
    %6 = vector.shape_cast %5 : vector<4xf32> to vector<4x1xf32>
    %7 = arith.mulf %2, %2 : vector<4x32xf32>
    %cst_7 = arith.constant dense<0.000000e+00> : vector<4xf32>
    %8 = vector.multi_reduction <add>, %7, %cst_7 [1] : vector<4x32xf32> to vector<4xf32>
    %9 = vector.shape_cast %8 : vector<4xf32> to vector<4x1xf32>
    %cst_8 = arith.constant 1.17549435E-38 : f32
    %10 = vector.broadcast %cst_8 : f32 to vector<4x1xf32>
    %11 = arith.maximumf %9, %10 : vector<4x1xf32>
    %cst_9 = arith.constant 0.000000e+00 : f32
    %12 = vector.broadcast %cst_9 : f32 to vector<4x1xf32>
    %13 = arith.maximumf %6, %12 : vector<4x1xf32>
    %14 = vector.broadcast %cst_9 : f32 to vector<4x1xf32>
    %15 = arith.subf %6, %14 : vector<4x1xf32>
    %16 = arith.cmpf one, %15, %15 : vector<4x1xf32>
    %17 = vector.broadcast %cst_9 : f32 to vector<4x1xf32>
    %18 = arith.addf %6, %17 : vector<4x1xf32>
    %19 = math.absf %15 : vector<4x1xf32>
    %cst_10 = arith.constant 0.000000e+00 : f32
    %20 = vector.broadcast %cst_10 : f32 to vector<4x1xf32>
    %21 = arith.subf %20, %19 : vector<4x1xf32>
    %22 = math.exp %21 : vector<4x1xf32>
    %23 = math.log1p %22 : vector<4x1xf32>
    %24 = arith.addf %13, %23 : vector<4x1xf32>
    %25 = arith.select %16, %18, %24 : vector<4x1xi1>, vector<4x1xf32>
    %cst_11 = arith.constant -1.000000e+00 : f32
    %26 = vector.broadcast %cst_11 : f32 to vector<4x1xf32>
    %27 = arith.addf %26, %25 : vector<4x1xf32>
    %28 = arith.subf %27, %6 : vector<4x1xf32>
    %29 = tpu.reciprocal %11 : vector<4x1xf32> -> vector<4x1xf32>
    %30 = arith.mulf %28, %29 : vector<4x1xf32>
    %31 = vector.broadcast %30 : vector<4x1xf32> to vector<4x32xf32>
    %32 = arith.mulf %31, %2 : vector<4x32xf32>
    %33 = arith.addf %1, %32 : vector<4x32xf32>
    %34 = arith.mulf %2, %0 : vector<4x32xf32>
    %cst_12 = arith.constant dense<0.000000e+00> : vector<4xf32>
    %35 = vector.multi_reduction <add>, %34, %cst_12 [1] : vector<4x32xf32> to vector<4xf32>
    %36 = vector.shape_cast %35 : vector<4xf32> to vector<4x1xf32>
    %37 = arith.addf %36, %3 : vector<4x1xf32>
    %38 = math.tanh %37 : vector<4x1xf32>
    %39 = vector.broadcast %38 : vector<4x1xf32> to vector<4x32xf32>
    %40 = arith.mulf %33, %39 : vector<4x32xf32>
    %41 = arith.addf %0, %40 : vector<4x32xf32>
    %c0_13 = arith.constant 0 : index
    %c0_14 = arith.constant 0 : index
    %42 = vector.load %arg5[%c0_13, %c0_14] : memref<4x32xf32, #tpu.memory_space<vmem>>, vector<4x32xf32>
    tpu.vector_store %arg5[%c0_13, %c0_14], %41 {strides = array<i32>} : memref<4x32xf32, #tpu.memory_space<vmem>>, vector<4x32xf32>,
    %43 = arith.mulf %38, %38 : vector<4x1xf32>
    %cst_15 = arith.constant 1.000000e+00 : f32
    %44 = vector.broadcast %cst_15 : f32 to vector<4x1xf32>
    %45 = arith.subf %44, %43 : vector<4x1xf32>
    %46 = arith.mulf %45, %27 : vector<4x1xf32>
    %cst_16 = arith.constant 1.000000e+00 : f32
    %47 = vector.broadcast %cst_16 : f32 to vector<4x1xf32>
    %48 = arith.addf %47, %46 : vector<4x1xf32>
    %49 = math.absf %48 : vector<4x1xf32>
    %50 = math.log %49 : vector<4x1xf32>
    %c0_17 = arith.constant 0 : index
    %c0_18 = arith.constant 0 : index
    %51 = vector.load %arg6[%c0_17, %c0_18] : memref<4x1xf32, #tpu.memory_space<vmem>>, vector<4x1xf32>
    tpu.vector_store %arg6[%c0_17, %c0_18], %50 {strides = array<i32>} : memref<4x1xf32, #tpu.memory_space<vmem>>, vector<4x1xf32>,
    return
  }
  func.func @transform_0(%arg0: i32) -> (i32, i32) {
    %c0_i32 = arith.constant 0 : i32
    %c0_i32_0 = arith.constant 0 : i32
    return %arg0, %c0_i32 : i32, i32
  }
  func.func @transform_1(%arg0: i32) -> (i32, i32) {
    %c0_i32 = arith.constant 0 : i32
    %c0_i32_0 = arith.constant 0 : i32
    return %arg0, %c0_i32 : i32, i32
  }
  func.func @transform_2(%arg0: i32) -> (i32, i32) {
    %c0_i32 = arith.constant 0 : i32
    %c0_i32_0 = arith.constant 0 : i32
    return %arg0, %c0_i32 : i32, i32
  }
  func.func @transform_3(%arg0: i32) -> (i32, i32) {
    %c0_i32 = arith.constant 0 : i32
    %c0_i32_0 = arith.constant 0 : i32
    return %arg0, %c0_i32 : i32, i32
  }
  func.func @transform_4(%arg0: i32) -> (i32, i32) {
    %c0_i32 = arith.constant 0 : i32
    %c0_i32_0 = arith.constant 0 : i32
    return %arg0, %c0_i32 : i32, i32
  }
  func.func @transform_5(%arg0: i32) -> (i32, i32) {
    %c0_i32 = arith.constant 0 : i32
    %c0_i32_0 = arith.constant 0 : i32
    return %arg0, %c0_i32 : i32, i32
  }
}

</mosaic_0001>

<llo_original>
// kernel: tpu_custom_call.1
$region0: #{tpu_custom_call.1}
  #allocation0 [shape = 'u32[]', space=smem, size = 0x4, offset = 0x4, fixed_abs, tag = 'smem constant byte address 0x4 - core index']
  #allocation1 [shape = 'u32[144,128]{1,0:T(1,128)}', space=vmem, size = 0x12000, scoped, tag = 'internal scratch']
  %s0 = inlined_call_operand.vmem [shape: f32[4,32], index: 0, kind: input, shape index: {}]
  %s1 = inlined_call_operand.vmem [shape: f32[4,32], index: 1, kind: input, shape index: {}]
  %s2 = inlined_call_operand.vmem [shape: f32[4,32], index: 2, kind: input, shape index: {}]
  %s3 = inlined_call_operand.vmem [shape: f32[4,1], index: 3, kind: input, shape index: {}]
  %s4 = inlined_call_operand.hbm [shape: f32[4,32], index: 4, kind: output, shape index: {0}]
  %s5 = inlined_call_operand.vmem [shape: f32[4,1], index: 5, kind: output, shape index: {1}]
  %6 = xla_tuple %s4, %s5
  %s7 = sld [smem:[#allocation0]]
  $region34: #{tpu_custom_call.1} parent=0
    _
  %s9 = ssub.s32 1, %s7
  %s10 = scalar_select 0, %s9, %s7
  $region1: #{tpu_custom_call.1} parent=0
    #allocation2 [shape = 'u8[2048]{0}', space=vmem, size = 0x800, scoped, tag = 'output window, operand 0, single buffered']
    #allocation3 [shape = 's32[1]{0}', space=sflag, size = 0x4, scoped, tag = 'scoped memory for tpu_custom_call.1']
    %11 = vsyncpa [#allocation3], 0
    // Predicated region
    $region2: #{tpu_custom_call.1} parent=1 // pred_check
      _
    $region3: #{tpu_custom_call.1} parent=1 // pred_check_branch
      %13 = sbr.rel (0) target = $region5
    $region4: #{tpu_custom_call.1} parent=1 // pred_region
      _
    $region5: #{tpu_custom_call.1} parent=1 // pred_fallthru
      _
    // Predicated region
    $region6: #{tpu_custom_call.1} parent=1 // pred_check
      _
    $region7: #{tpu_custom_call.1} parent=1 // pred_check_branch
      %15 = sbr.rel (0) target = $region9
    $region8: #{tpu_custom_call.1} parent=1 // pred_region
      _
    $region9: #{tpu_custom_call.1} parent=1 // pred_fallthru
      _
    // Predicated region
    $region10: #{tpu_custom_call.1} parent=1 // pred_check
      _
    $region11: #{tpu_custom_call.1} parent=1 // pred_check_branch
      %17 = sbr.rel (0) target = $region13
    $region12: #{tpu_custom_call.1} parent=1 // pred_region
      _
    $region13: #{tpu_custom_call.1} parent=1 // pred_fallthru
      _
    // Predicated region
    $region14: #{tpu_custom_call.1} parent=1 // pred_check
      _
    $region15: #{tpu_custom_call.1} parent=1 // pred_check_branch
      %19 = sbr.rel (0) target = $region17
    $region16: #{tpu_custom_call.1} parent=1 // pred_region
      _
    $region17: #{tpu_custom_call.1} parent=1 // pred_fallthru
      _
    %v20 = vld [vmem:[%s0] sm:$0xf]
    %v21 = vld [vmem:[%s1] sm:$0xf]
    %v22 = vld [vmem:[%s2] sm:$0xf]
    %v23 = vld [vmem:[%s3] sm:$0xf]
    %v24 = vmul.f32 %v22, %v21
    %vm25 = vcmask 257024
    %v26 = vsel %vm25, %v24, 0.0
    %27 = vadd.xlane.f32.xlu0 %v26
    %v28 = vpop.xlane.xlu0 %27
    %v29 = vmul.f32 %v22, %v22
    %v30 = vsel %vm25, %v29, 0.0
    %31 = vadd.xlane.f32.xlu0 %v30
    %v32 = vpop.xlane.xlu0 %31
    %v33 = vmax.f32 %v32, 1.1754944e-38
    %v34 = vmax.f32 %v28, 0.0
    %vm35 = vcmp.ne.f32.partialorder %v28, %v28
    %v36 = vadd.f32 %v28, 0.0
    %v37 = vand.u32 2147483647, %v28
    %v38 = vsub.f32 0.0, %v37
    %v39 = vmul.f32 %v38, 1.442695
    %v40 = vpow.pop %v39
    %v41 = vadd.f32 %v40, 1.0
    %v42 = vlog2.pop %v41
    %v43 = vmul.f32 %v42, 0.6931472
    %v44 = vmul.f32 -0.5, %v40
    %v45 = vadd.f32 %v44, 1.0
    %v46 = vmul.f32 %v45, %v40
    %v47 = vand.u32 2147483647, %v40
    %vm48 = vcmp.lt.f32.partialorder %v47, 0.0004427343
    %v49 = vsel %vm48, %v46, %v43
    %v50 = vadd.f32 %v34, %v49
    %v51 = vsel %vm35, %v36, %v50
    %v52 = vadd.f32 %v51, -1.0
    %v53 = vsub.f32 %v52, %v28
    %v54 = vrcp.pop %v33
    %v55 = vmul.f32 %v53, %v54
    %v56 = vmul.f32 %v55, %v22
    %v57 = vadd.f32 %v21, %v56
    %v58 = vmul.f32 %v22, %v20
    %v59 = vsel %vm25, %v58, 0.0
    %60 = vadd.xlane.f32.xlu0 %v59
    %v61 = vpop.xlane.xlu0 %60
    %v62 = vadd.f32 %v61, %v23
    %v63 = vtanh.pop %v62
    %65 = vset.pattern.permute.xlu0 0
    %66 = vperm.xlu0 %65, %v63
    %v67 = vpop.permute.xlu0 %66
    %v69 = vmul.f32 %v57, %v67
    %v70 = vadd.f32 %v20, %v69
    %71 = vst.msk [vmem:[#allocation2] sm:$0xf] %vm25, %v70
    %v72 = vmul.f32 %v63, %v63
    %v73 = vsub.f32 1.0, %v72
    %v74 = vmul.f32 %v73, %v52
    %v75 = vadd.f32 %v74, 1.0
    %v76 = vand.u32 2147483647, %v75
    %v77 = vlog2.pop %v76
    %v78 = vmul.f32 %v77, 0.6931472
    %vm79 = vcmask 3072
    %80 = vst.msk [vmem:[%s5] sm:$0xf] %vm79, %v78
    // Predicated region
    $region18: #{tpu_custom_call.1} parent=1 // pred_check
      _
    $region19: #{tpu_custom_call.1} parent=1 // pred_check_branch
      %82 = sbr.rel (0) target = $region21
    $region20: #{tpu_custom_call.1} parent=1 // pred_region
      %s84 = ssub.s32 64, 64
      %85 = vsyncadd [#allocation3], %s84
      %s87 = sshll.u32 [#allocation2], 4
      %s88 = int_to_ptr.vmem [resolvable:$true] %s87
      %90 = dma.vmem_to_hbm [thread:$0]  %s88, 64, %s4, [#allocation3]
    $region21: #{tpu_custom_call.1} parent=1 // pred_fallthru
      _
    // Predicated region
    $region22: #{tpu_custom_call.1} parent=1 // pred_check
      _
    $region23: #{tpu_custom_call.1} parent=1 // pred_check_branch
      %92 = sbr.rel (0) target = $region25
    $region24: #{tpu_custom_call.1} parent=1 // pred_region
      _
    $region25: #{tpu_custom_call.1} parent=1 // pred_fallthru
      _
    // Predicated region
    $region26: #{tpu_custom_call.1} parent=1 // pred_check
      _
    $region27: #{tpu_custom_call.1} parent=1 // pred_check_branch
      %94 = sbr.rel (0) target = $region29
    $region28: #{tpu_custom_call.1} parent=1 // pred_region
      %95 = dma.done [#allocation3], 64
    $region29: #{tpu_custom_call.1} parent=1 // pred_fallthru
      _
    // Predicated region
    $region30: #{tpu_custom_call.1} parent=1 // pred_check
      _
    $region31: #{tpu_custom_call.1} parent=1 // pred_check_branch
      %97 = sbr.rel (0) target = $region33
    $region32: #{tpu_custom_call.1} parent=1 // pred_region
      _
    $region33: #{tpu_custom_call.1} parent=1 // pred_fallthru
      _
    %98 = vsyncpa [#allocation3], 1

</llo_original>
